<compile_context>
chip_gen: v5e
topology: v5e:2x2
jax: 0.10.0
libtpu: 0.0.40
codegen_flags: <defaults>
</compile_context>

<pallas_src>
import jax
import jax.numpy as jnp
from jax import lax
from jax.experimental import pallas as pl
from jax.experimental.pallas import tpu as pltpu


NEG_SLOPE = 0.1


def _leaky_relu(x):
    # valid for slope in (0, 1); 2 VPU ops instead of cmp+mul+select
    return jnp.maximum(x, NEG_SLOPE * x)


def _round_up(n, m):
    return ((n + m - 1) // m) * m


def _cdiv(a, b):
    return (a + b - 1) // b


def _bf16_elementwise_ok():
    """bf16 bias/LeakyReLU only where the VPU supports bf16 (v6e / v7x)."""
    try:
        kind = jax.devices()[0].device_kind.lower()
    except Exception:
        return False
    if "tpu" not in kind:
        return False
    return not any(tag in kind for tag in ("v2", "v3", "v4", "v5"))


def _make_kernel(tile, p_true, ntpc, num_chunks, act_dtype):
    nt = ntpc * num_chunks
    needs_mask = (p_true % tile) != 0
    rem = p_true - (nt - 1) * tile        # valid rows in the global last tile

    def kernel(patches_ref,
               w0_ref, b0_ref, w1_ref, b1_ref, w2_ref, b2_ref, w3_ref, b3_ref,
               out_ref, acc_ref):
        c = pl.program_id(1)
        t = pl.program_id(2)

        # init pooled-sum accumulator on the first P-tile of each (b, chunk)
        @pl.when(t == 0)
        def _():
            acc_ref[...] = jnp.zeros_like(acc_ref)

        x = patches_ref[0]                                 # (tile, 48) bf16

        def layer(h, w_ref, b_ref):
            # bf16 MXU operands; accumulate/bias/activation in act_dtype
            out = jnp.dot(h.astype(jnp.bfloat16), w_ref[...],
                          preferred_element_type=act_dtype) + b_ref[...]
            return _leaky_relu(out)

        h = layer(x, w0_ref, b0_ref)      # Conv2d(3,128,4,4)  as patch matmul
        h = layer(h, w1_ref, b1_ref)      # Conv2d(128,128,1)
        h = layer(h, w2_ref, b2_ref)      # Conv2d(128,128,1)
        h = layer(h, w3_ref, b3_ref)      # Conv2d(128,128,1)  -> (tile, 128)

        def accumulate(hv):
            acc_ref[...] += jnp.sum(hv.astype(jnp.float32), axis=0,
                                    keepdims=True)

        if needs_mask:
            # only the global last tile contains undefined (edge-block) rows
            is_ragged = jnp.logical_and(c == num_chunks - 1, t == ntpc - 1)

            @pl.when(jnp.logical_not(is_ragged))
            def _():
                accumulate(h)

            @pl.when(is_ragged)
            def _():
                row = lax.broadcasted_iota(jnp.int32, (tile, 1), 0)
                accumulate(jnp.where(row < rem, h, jnp.zeros_like(h)))
        else:
            accumulate(h)

        # emit the lane-dense pooled sum for this (sample, chunk)
        @pl.when(t == ntpc - 1)
        def _():
            out_ref[0] = acc_ref[...]

    return kernel


def _pallas_classifier(patches, weights, *, B, P, tile, ntpc, num_chunks,
                       act_dtype, single_buffer_weights):
    kernel = _make_kernel(tile, P, ntpc, num_chunks, act_dtype)

    def wspec(arr):
        idx = lambda b, c, t, _n=arr.ndim: (0,) * _n
        if single_buffer_weights:
            # constant index_map -> resident weights; no double buffering
            return pl.BlockSpec(arr.shape, idx, pipeline_mode=pl.Buffered(1))
        return pl.BlockSpec(arr.shape, idx)

    in_specs = [pl.BlockSpec((1, tile, 48),
                             lambda b, c, t: (b, c * ntpc + t, 0))]
    in_specs += [wspec(w) for w in weights]

    nt = ntpc * num_chunks
    flops = 2 * B * nt * tile * (48 * 128 + 3 * 128 * 128)
    bytes_accessed = int(
        patches.size * patches.dtype.itemsize
        + sum(int(w.size) * w.dtype.itemsize for w in weights)
        + B * num_chunks * 128 * 4)

    return pl.pallas_call(
        kernel,
        out_shape=jax.ShapeDtypeStruct((B, num_chunks, 128), jnp.float32),
        grid_spec=pltpu.PrefetchScalarGridSpec(
            num_scalar_prefetch=0,
            grid=(B, num_chunks, ntpc),       # P-reduction last
            in_specs=in_specs,
            out_specs=pl.BlockSpec((1, 1, 128), lambda b, c, t: (b, c, 0)),
            scratch_shapes=[pltpu.VMEM((1, 128), jnp.float32)],
        ),
        compiler_params=pltpu.CompilerParams(
            dimension_semantics=("parallel", "parallel", "arbitrary"),
            vmem_limit_bytes=32 * 1024 * 1024,
        ),
        cost_estimate=pl.CostEstimate(
            flops=flops, transcendentals=0, bytes_accessed=bytes_accessed),
    )(patches, *weights)


def classifier_forward(x, params, *, tile_p=2048):
    """x: (B, 3, H, W) float32 NCHW.  Returns (B, 3) float32."""
    B, C, H, W = x.shape
    assert C == 3 and H % 4 == 0 and W % 4 == 0
    Ho, Wo = H // 4, W // 4
    P = Ho * Wo

    # Patch extraction as one fused XLA reshape/transpose, (c, kh, kw)-major.
    # TODO(synk): fold this relayout into the kernel via manual strided DMA to
    # avoid the extra HBM pass on very large inputs.
    patches = (x.reshape(B, C, Ho, 4, Wo, 4)
                .transpose(0, 2, 4, 1, 3, 5)
                .reshape(B, P, C * 16)).astype(jnp.bfloat16)

    # P tiling: one block if it fits, else big 256-aligned tiles; the ragged
    # last tile is handled by the in-kernel row mask (no jnp.pad copy).
    if P <= tile_p:
        tile = P
    else:
        tile = _round_up(tile_p, 256)
    nt = _cdiv(P, tile)
    # Split the P axis into two parallel chunks when the tile count divides
    # evenly, so v7x's second TensorCore has work at batch 1.
    num_chunks = 2 if (nt >= 2 and nt % 2 == 0) else 1
    ntpc = nt // num_chunks

    act_dtype = jnp.bfloat16 if _bf16_elementwise_ok() else jnp.float32

    # Weights: torch layouts -> matmul layouts (bf16 MXU operands), biases in
    # the activation dtype.  Fold conv4 + Linear through the mean:
    #   mean(h@W4+b4)@Wl+bl == mean(h)@(W4@Wl) + (b4@Wl+bl)
    w0 = params["w0"].reshape(128, 48).T.astype(jnp.bfloat16)      # (48, 128)
    w1 = params["w1"].reshape(128, 128).T.astype(jnp.bfloat16)
    w2 = params["w2"].reshape(128, 128).T.astype(jnp.bfloat16)
    w3 = params["w3"].reshape(128, 128).T.astype(jnp.bfloat16)
    b0 = params["b0"].reshape(1, 128).astype(act_dtype)
    b1 = params["b1"].reshape(1, 128).astype(act_dtype)
    b2 = params["b2"].reshape(1, 128).astype(act_dtype)
    b3 = params["b3"].reshape(1, 128).astype(act_dtype)
    weights = (w0, b0, w1, b1, w2, b2, w3, b3)

    w4 = params["w4"].reshape(32, 128).T.astype(jnp.float32)       # (128, 32)
    wl = params["wl"].T.astype(jnp.float32)                        # (32, 3)
    wf = w4 @ wl                                                   # (128, 3)
    bf = (params["b4"].reshape(1, 32).astype(jnp.float32) @ wl
          + params["bl"].reshape(1, 3).astype(jnp.float32))        # (1, 3)

    kwargs = dict(B=B, P=P, tile=tile, ntpc=ntpc, num_chunks=num_chunks,
                  act_dtype=act_dtype)
    try:
        sums = _pallas_classifier(patches, weights,
                                  single_buffer_weights=True, **kwargs)
    except (pltpu.LoweringException, NotImplementedError, TypeError,
            ValueError):
        # Fallback if this JAX build rejects pipeline_mode=pl.Buffered(1).
        sums = _pallas_classifier(patches, weights,
                                  single_buffer_weights=False, **kwargs)

    # Finalize outside the kernel (trivial f32 XLA ops): global average pool
    # over all chunks, then the folded (128, 3) projection.
    pooled = jnp.sum(sums, axis=1) * (1.0 / P)        # (B, 128)
    return pooled @ wf + bf                           # (B, 3)


def init_params(key):
    """Deterministic synthetic He-style init (torch weight layouts)."""
    ks = jax.random.split(key, 12)

    def w(k, shape, fan_in):
        return jax.random.normal(k, shape, jnp.float32) * jnp.sqrt(2.0 / fan_in)

    def b(k, n):
        return jax.random.normal(k, (n,), jnp.float32) * 0.05

    return {
        # Conv2d weight (Cout, Cin, kh, kw), Linear weight (out, in)
        "w0": w(ks[0], (128, 3, 4, 4), 48),    "b0": b(ks[6], 128),
        "w1": w(ks[1], (128, 128, 1, 1), 128), "b1": b(ks[7], 128),
        "w2": w(ks[2], (128, 128, 1, 1), 128), "b2": b(ks[8], 128),
        "w3": w(ks[3], (128, 128, 1, 1), 128), "b3": b(ks[9], 128),
        "w4": w(ks[4], (32, 128, 1, 1), 128),  "b4": b(ks[10], 32),
        "wl": w(ks[5], (3, 32), 32),           "bl": b(ks[11], 3),
    }


def reference_forward(x, p):
    """Pure-JAX f32 reference matching the PyTorch module exactly."""
    dn = ("NCHW", "OIHW", "NCHW")

    def conv(h, w, b, stride):
        out = lax.conv_general_dilated(h, w, window_strides=(stride, stride),
                                       padding="VALID", dimension_numbers=dn)
        return out + b[None, :, None, None]

    h = _leaky_relu(conv(x, p["w0"], p["b0"], 4))
    h = _leaky_relu(conv(h, p["w1"], p["b1"], 1))
    h = _leaky_relu(conv(h, p["w2"], p["b2"], 1))
    h = _leaky_relu(conv(h, p["w3"], p["b3"], 1))
    h = conv(h, p["w4"], p["b4"], 1)                 # (B, 32, Ho, Wo)
    pooled = h.mean(axis=(2, 3))                     # global AvgPool + view
    return pooled @ p["wl"].T + p["bl"]              # Linear(32, 3)


if __name__ == "__main__":
    key = jax.random.PRNGKey(0)
    k_x1, k_x2, k_x3, k_p = jax.random.split(key, 4)
    params = init_params(k_p)

    # Case 1: small input -> single P-tile (P = 64), no masking.
    x1 = jax.random.normal(k_x1, (2, 3, 32, 32), jnp.float32)
    out1 = jax.block_until_ready(classifier_forward(x1, params))
    ref1 = reference_forward(x1, params)
    assert out1.shape == (2, 3)
    assert jnp.allclose(out1, ref1, rtol=5e-2, atol=2e-2), (out1, ref1)

    # Case 2: odd tile count -> single chunk, ragged last tile exercised via
    # the gated in-kernel row mask (P=576, tile=256, nt=3, rem=64).
    x2 = jax.random.normal(k_x2, (2, 3, 96, 96), jnp.float32)
    out2 = jax.block_until_ready(classifier_forward(x2, params, tile_p=256))
    ref2 = reference_forward(x2, params)
    assert jnp.allclose(out2, ref2, rtol=5e-2, atol=2e-2), (out2, ref2)

    # Case 3: even tile count at batch 1 -> two parallel P chunks (v7x core
    # split) plus a ragged final tile (P=900, tile=256, nt=4, rem=132).
    x3 = jax.random.normal(k_x3, (1, 3, 120, 120), jnp.float32)
    out3 = jax.block_until_ready(classifier_forward(x3, params, tile_p=256))
    ref3 = reference_forward(x3, params)
    assert jnp.allclose(out3, ref3, rtol=5e-2, atol=2e-2), (out3, ref3)

    print("KERNEL_OK")
</pallas_src>

<mosaic_0001>
module attributes {stable_mosaic.version = 11 : i64} {
  func.func @kernel(%arg0: i32, %arg1: i32, %arg2: i32, %arg3: memref<1x64x48xbf16, #tpu.memory_space<vmem>>, %arg4: memref<48x128xbf16, #tpu.memory_space<vmem>>, %arg5: memref<1x128xf32, #tpu.memory_space<vmem>>, %arg6: memref<128x128xbf16, #tpu.memory_space<vmem>>, %arg7: memref<1x128xf32, #tpu.memory_space<vmem>>, %arg8: memref<128x128xbf16, #tpu.memory_space<vmem>>, %arg9: memref<1x128xf32, #tpu.memory_space<vmem>>, %arg10: memref<128x128xbf16, #tpu.memory_space<vmem>>, %arg11: memref<1x128xf32, #tpu.memory_space<vmem>>, %arg12: memref<1x1x128xf32, #tpu.memory_space<vmem>>, %arg13: memref<1x128xf32, #tpu.memory_space<vmem>>) attributes {dimension_semantics = [#tpu.dimension_semantics<parallel>, #tpu.dimension_semantics<parallel>, #tpu.dimension_semantics<arbitrary>], iteration_bounds = array<i64: 2, 1, 1>, scalar_prefetch = 0 : i64, scratch_operands = 1 : i64, tpu.core_type = #tpu.core_type<tc>, window_params = [{transform_indices = @transform_0, window_bounds = array<i64: 1, 64, 48>}, {pipeline_mode = #tpu.pipeline_mode<synchronous>, transform_indices = @transform_1, window_bounds = array<i64: 48, 128>}, {pipeline_mode = #tpu.pipeline_mode<synchronous>, transform_indices = @transform_2, window_bounds = array<i64: 1, 128>}, {pipeline_mode = #tpu.pipeline_mode<synchronous>, transform_indices = @transform_3, window_bounds = array<i64: 128, 128>}, {pipeline_mode = #tpu.pipeline_mode<synchronous>, transform_indices = @transform_4, window_bounds = array<i64: 1, 128>}, {pipeline_mode = #tpu.pipeline_mode<synchronous>, transform_indices = @transform_5, window_bounds = array<i64: 128, 128>}, {pipeline_mode = #tpu.pipeline_mode<synchronous>, transform_indices = @transform_6, window_bounds = array<i64: 1, 128>}, {pipeline_mode = #tpu.pipeline_mode<synchronous>, transform_indices = @transform_7, window_bounds = array<i64: 128, 128>}, {pipeline_mode = #tpu.pipeline_mode<synchronous>, transform_indices = @transform_8, window_bounds = array<i64: 1, 128>}, {transform_indices = @transform_9, window_bounds = array<i64: 1, 1, 128>}]} {
    %c0_i32 = arith.constant 0 : i32
    %0 = arith.cmpi eq, %arg2, %c0_i32 : i32
    %1 = arith.extui %0 : i1 to i32
    %c0_i32_0 = arith.constant 0 : i32
    %2 = arith.cmpi ne, %1, %c0_i32_0 : i32
    scf.if %2 {
      %cst_33 = arith.constant 0.000000e+00 : f32
      %48 = vector.broadcast %cst_33 : f32 to vector<1x128xf32>
      %c0_34 = arith.constant 0 : index
      %c0_35 = arith.constant 0 : index
      %49 = vector.load %arg13[%c0_34, %c0_35] : memref<1x128xf32, #tpu.memory_space<vmem>>, vector<1x128xf32>
      tpu.vector_store %arg13[%c0_34, %c0_35], %48 {strides = array<i32>} : memref<1x128xf32, #tpu.memory_space<vmem>>, vector<1x128xf32>,
    } else {
    }
    %c0 = arith.constant 0 : index
    %c0_1 = arith.constant 0 : index
    %c0_2 = arith.constant 0 : index
    %3 = vector.load %arg3[%c0, %c0_1, %c0_2] : memref<1x64x48xbf16, #tpu.memory_space<vmem>>, vector<1x64x48xbf16>
    %4 = vector.shape_cast %3 : vector<1x64x48xbf16> to vector<64x48xbf16>
    %c0_3 = arith.constant 0 : index
    %c0_4 = arith.constant 0 : index
    %5 = vector.load %arg4[%c0_3, %c0_4] : memref<48x128xbf16, #tpu.memory_space<vmem>>, vector<48x128xbf16>
    %cst = arith.constant dense<0.000000e+00> : vector<64x128xf32>
    %6 = tpu.matmul %4, %5, %cst {dimension_numbers = #tpu.dot_dimension_numbers<[1], [0], [0], [1], [0, 0, 1, 1], [], []>} : vector<64x48xbf16>, vector<48x128xbf16>, vector<64x128xf32> -> vector<64x128xf32>
    %c0_5 = arith.constant 0 : index
    %c0_6 = arith.constant 0 : index
    %7 = vector.load %arg5[%c0_5, %c0_6] : memref<1x128xf32, #tpu.memory_space<vmem>>, vector<1x128xf32>
    %8 = vector.broadcast %7 : vector<1x128xf32> to vector<64x128xf32>
    %9 = arith.addf %6, %8 : vector<64x128xf32>
    %cst_7 = arith.constant 1.000000e-01 : f32
    %10 = vector.broadcast %cst_7 : f32 to vector<64x128xf32>
    %11 = arith.mulf %10, %9 : vector<64x128xf32>
    %12 = arith.maximumf %9, %11 : vector<64x128xf32>
    %13 = arith.truncf %12 : vector<64x128xf32> to vector<64x128xbf16>
    %c0_8 = arith.constant 0 : index
    %c0_9 = arith.constant 0 : index
    %14 = vector.load %arg6[%c0_8, %c0_9] : memref<128x128xbf16, #tpu.memory_space<vmem>>, vector<128x128xbf16>
    %cst_10 = arith.constant dense<0.000000e+00> : vector<64x128xf32>
    %15 = tpu.matmul %13, %14, %cst_10 {dimension_numbers = #tpu.dot_dimension_numbers<[1], [0], [0], [1], [0, 0, 1, 1], [], []>} : vector<64x128xbf16>, vector<128x128xbf16>, vector<64x128xf32> -> vector<64x128xf32>
    %c0_11 = arith.constant 0 : index
    %c0_12 = arith.constant 0 : index
    %16 = vector.load %arg7[%c0_11, %c0_12] : memref<1x128xf32, #tpu.memory_space<vmem>>, vector<1x128xf32>
    %17 = vector.broadcast %16 : vector<1x128xf32> to vector<64x128xf32>
    %18 = arith.addf %15, %17 : vector<64x128xf32>
    %cst_13 = arith.constant 1.000000e-01 : f32
    %19 = vector.broadcast %cst_13 : f32 to vector<64x128xf32>
    %20 = arith.mulf %19, %18 : vector<64x128xf32>
    %21 = arith.maximumf %18, %20 : vector<64x128xf32>
    %22 = arith.truncf %21 : vector<64x128xf32> to vector<64x128xbf16>
    %c0_14 = arith.constant 0 : index
    %c0_15 = arith.constant 0 : index
    %23 = vector.load %arg8[%c0_14, %c0_15] : memref<128x128xbf16, #tpu.memory_space<vmem>>, vector<128x128xbf16>
    %cst_16 = arith.constant dense<0.000000e+00> : vector<64x128xf32>
    %24 = tpu.matmul %22, %23, %cst_16 {dimension_numbers = #tpu.dot_dimension_numbers<[1], [0], [0], [1], [0, 0, 1, 1], [], []>} : vector<64x128xbf16>, vector<128x128xbf16>, vector<64x128xf32> -> vector<64x128xf32>
    %c0_17 = arith.constant 0 : index
    %c0_18 = arith.constant 0 : index
    %25 = vector.load %arg9[%c0_17, %c0_18] : memref<1x128xf32, #tpu.memory_space<vmem>>, vector<1x128xf32>
    %26 = vector.broadcast %25 : vector<1x128xf32> to vector<64x128xf32>
    %27 = arith.addf %24, %26 : vector<64x128xf32>
    %cst_19 = arith.constant 1.000000e-01 : f32
    %28 = vector.broadcast %cst_19 : f32 to vector<64x128xf32>
    %29 = arith.mulf %28, %27 : vector<64x128xf32>
    %30 = arith.maximumf %27, %29 : vector<64x128xf32>
    %31 = arith.truncf %30 : vector<64x128xf32> to vector<64x128xbf16>
    %c0_20 = arith.constant 0 : index
    %c0_21 = arith.constant 0 : index
    %32 = vector.load %arg10[%c0_20, %c0_21] : memref<128x128xbf16, #tpu.memory_space<vmem>>, vector<128x128xbf16>
    %cst_22 = arith.constant dense<0.000000e+00> : vector<64x128xf32>
    %33 = tpu.matmul %31, %32, %cst_22 {dimension_numbers = #tpu.dot_dimension_numbers<[1], [0], [0], [1], [0, 0, 1, 1], [], []>} : vector<64x128xbf16>, vector<128x128xbf16>, vector<64x128xf32> -> vector<64x128xf32>
    %c0_23 = arith.constant 0 : index
    %c0_24 = arith.constant 0 : index
    %34 = vector.load %arg11[%c0_23, %c0_24] : memref<1x128xf32, #tpu.memory_space<vmem>>, vector<1x128xf32>
    %35 = vector.broadcast %34 : vector<1x128xf32> to vector<64x128xf32>
    %36 = arith.addf %33, %35 : vector<64x128xf32>
    %cst_25 = arith.constant 1.000000e-01 : f32
    %37 = vector.broadcast %cst_25 : f32 to vector<64x128xf32>
    %38 = arith.mulf %37, %36 : vector<64x128xf32>
    %39 = arith.maximumf %36, %38 : vector<64x128xf32>
    %c0_26 = arith.constant 0 : index
    %c0_27 = arith.constant 0 : index
    %40 = vector.load %arg13[%c0_26, %c0_27] : memref<1x128xf32, #tpu.memory_space<vmem>>, vector<1x128xf32>
    %cst_28 = arith.constant dense<0.000000e+00> : vector<128xf32>
    %41 = vector.multi_reduction <add>, %39, %cst_28 [0] : vector<64x128xf32> to vector<128xf32>
    %42 = vector.shape_cast %41 : vector<128xf32> to vector<1x128xf32>
    %43 = arith.addf %40, %42 : vector<1x128xf32>
    %c0_29 = arith.constant 0 : index
    %c0_30 = arith.constant 0 : index
    %44 = vector.load %arg13[%c0_29, %c0_30] : memref<1x128xf32, #tpu.memory_space<vmem>>, vector<1x128xf32>
    tpu.vector_store %arg13[%c0_29, %c0_30], %43 {strides = array<i32>} : memref<1x128xf32, #tpu.memory_space<vmem>>, vector<1x128xf32>,
    %c0_i32_31 = arith.constant 0 : i32
    %45 = arith.cmpi eq, %arg2, %c0_i32_31 : i32
    %46 = arith.extui %45 : i1 to i32
    %c0_i32_32 = arith.constant 0 : i32
    %47 = arith.cmpi ne, %46, %c0_i32_32 : i32
    scf.if %47 {
      %c0_33 = arith.constant 0 : index
      %c0_34 = arith.constant 0 : index
      %48 = vector.load %arg13[%c0_33, %c0_34] : memref<1x128xf32, #tpu.memory_space<vmem>>, vector<1x128xf32>
      %c0_35 = arith.constant 0 : index
      %c0_36 = arith.constant 0 : index
      %c0_37 = arith.constant 0 : index
      %49 = vector.load %arg12[%c0_35, %c0_36, %c0_37] : memref<1x1x128xf32, #tpu.memory_space<vmem>>, vector<1x1x128xf32>
      %50 = vector.shape_cast %49 : vector<1x1x128xf32> to vector<1x128xf32>
      %51 = vector.shape_cast %48 : vector<1x128xf32> to vector<1x1x128xf32>
      tpu.vector_store %arg12[%c0_35, %c0_36, %c0_37], %51 {strides = array<i32>} : memref<1x1x128xf32, #tpu.memory_space<vmem>>, vector<1x1x128xf32>,
    } else {
    }
    return
  }
  func.func @transform_0(%arg0: i32, %arg1: i32, %arg2: i32) -> (i32, i32, i32) {
    %c1_i32 = arith.constant 1 : i32
    %0 = arith.muli %arg1, %c1_i32 : i32
    %1 = arith.addi %0, %arg2 : i32
    %c0_i32 = arith.constant 0 : i32
    %c0_i32_0 = arith.constant 0 : i32
    return %arg0, %1, %c0_i32 : i32, i32, i32
  }
  func.func @transform_1(%arg0: i32, %arg1: i32, %arg2: i32) -> (i32, i32) {
    %c0_i32 = arith.constant 0 : i32
    %c0_i32_0 = arith.constant 0 : i32
    %c0_i32_1 = arith.constant 0 : i32
    return %c0_i32, %c0_i32_0 : i32, i32
  }
  func.func @transform_2(%arg0: i32, %arg1: i32, %arg2: i32) -> (i32, i32) {
    %c0_i32 = arith.constant 0 : i32
    %c0_i32_0 = arith.constant 0 : i32
    %c0_i32_1 = arith.constant 0 : i32
    return %c0_i32, %c0_i32_0 : i32, i32
  }
  func.func @transform_3(%arg0: i32, %arg1: i32, %arg2: i32) -> (i32, i32) {
    %c0_i32 = arith.constant 0 : i32
    %c0_i32_0 = arith.constant 0 : i32
    %c0_i32_1 = arith.constant 0 : i32
    return %c0_i32, %c0_i32_0 : i32, i32
  }
  func.func @transform_4(%arg0: i32, %arg1: i32, %arg2: i32) -> (i32, i32) {
    %c0_i32 = arith.constant 0 : i32
    %c0_i32_0 = arith.constant 0 : i32
    %c0_i32_1 = arith.constant 0 : i32
    return %c0_i32, %c0_i32_0 : i32, i32
  }
  func.func @transform_5(%arg0: i32, %arg1: i32, %arg2: i32) -> (i32, i32) {
    %c0_i32 = arith.constant 0 : i32
    %c0_i32_0 = arith.constant 0 : i32
    %c0_i32_1 = arith.constant 0 : i32
    return %c0_i32, %c0_i32_0 : i32, i32
  }
  func.func @transform_6(%arg0: i32, %arg1: i32, %arg2: i32) -> (i32, i32) {
    %c0_i32 = arith.constant 0 : i32
    %c0_i32_0 = arith.constant 0 : i32
    %c0_i32_1 = arith.constant 0 : i32
    return %c0_i32, %c0_i32_0 : i32, i32
  }
  func.func @transform_7(%arg0: i32, %arg1: i32, %arg2: i32) -> (i32, i32) {
    %c0_i32 = arith.constant 0 : i32
    %c0_i32_0 = arith.constant 0 : i32
    %c0_i32_1 = arith.constant 0 : i32
    return %c0_i32, %c0_i32_0 : i32, i32
  }
  func.func @transform_8(%arg0: i32, %arg1: i32, %arg2: i32) -> (i32, i32) {
    %c0_i32 = arith.constant 0 : i32
    %c0_i32_0 = arith.constant 0 : i32
    %c0_i32_1 = arith.constant 0 : i32
    return %c0_i32, %c0_i32_0 : i32, i32
  }
  func.func @transform_9(%arg0: i32, %arg1: i32, %arg2: i32) -> (i32, i32, i32) {
    %c0_i32 = arith.constant 0 : i32
    %c0_i32_0 = arith.constant 0 : i32
    return %arg0, %arg1, %c0_i32 : i32, i32, i32
  }
}

</mosaic_0001>

<llo_original>
// kernel: tpu_custom_call.1
$region0: #{tpu_custom_call.1}
  #allocation0 [shape = 'u32[]', space=smem, size = 0x4, offset = 0x4, fixed_abs, tag = 'smem constant byte address 0x4 - core index']
  #allocation1 [shape = 'u32[72,128]{1,0:T(1,128)}', space=vmem, size = 0x9000, scoped, tag = 'internal scratch']
  #allocation2 [shape = 'f32[1,128]{1,0:T(1,128)}', space=vmem, size = 0x200, scoped, tag = 'scratch operand']
  %s0 = inlined_call_operand.vmem [shape: bf16[2,64,48], index: 0, kind: input, shape index: {}]
  %s1 = inlined_call_operand.vmem [shape: bf16[48,128], index: 1, kind: input, shape index: {}]
  %s2 = inlined_call_operand.vmem [shape: f32[1,128], index: 2, kind: input, shape index: {}]
  %s3 = inlined_call_operand.vmem [shape: bf16[128,128], index: 3, kind: input, shape index: {}]
  %s4 = inlined_call_operand.vmem [shape: f32[1,128], index: 4, kind: input, shape index: {}]
  %s5 = inlined_call_operand.hbm [shape: bf16[128,128], index: 5, kind: input, shape index: {}]
  %s6 = inlined_call_operand.vmem [shape: f32[1,128], index: 6, kind: input, shape index: {}]
  %s7 = inlined_call_operand.hbm [shape: bf16[128,128], index: 7, kind: input, shape index: {}]
  %s8 = inlined_call_operand.vmem [shape: f32[1,128], index: 8, kind: input, shape index: {}]
  %s9 = inlined_call_operand.hbm [shape: f32[2,1,128], index: 9, kind: output, shape index: {}]
  %s10 = sld [smem:[#allocation0]]
  $region85: #{tpu_custom_call.1} parent=0
    _
  %s12 = ssub.s32 1, %s10
  %s13 = scalar_select 0, %s12, %s10
  $region1: #{tpu_custom_call.1} parent=0
    #allocation3 [shape = 'u8[32768]{0}', space=vmem, size = 0x8000, scoped, tag = 'input window, operand 5, single buffered']
    #allocation4 [shape = 's32[2]{0}', space=sflag, size = 0x8, scoped, tag = 'scoped memory for tpu_custom_call.1']
    #allocation5 [shape = 's32[2]{0}', space=sflag, size = 0x8, scoped, tag = 'scoped memory for tpu_custom_call.1']
    #allocation6 [shape = 'u8[32768]{0}', space=vmem, size = 0x8000, scoped, tag = 'input window, operand 7, single buffered']
    #allocation7 [shape = 's32[1]{0}', space=sflag, size = 0x4, scoped, tag = 'scoped memory for tpu_custom_call.1']
    #allocation8 [shape = 'u8[1024]{0}', space=vmem, size = 0x400, scoped, tag = 'output window, operand 0']
    %14 = vsyncpa [#allocation4], 0
    %15 = vsyncpa [#allocation7], 0
    %16 = vsyncpa [#allocation5], 0
    %s17 = scalar_lea.sflag [#allocation5], 1
    %18 = vsyncpa %s17, 0
    loop: start=0, step=1, limit=4
    $region2: #{tpu_custom_call.1} parent=1 // loop_pre_header
      _
    $region3: #{tpu_custom_call.1} parent=1 // loop_header
      %s20 = sphi 0, %s24
      %p21 = scmp.ge.s32.totalorder %s20, 4
      %s27 = sphi 0, %s46
      %s28 = sphi 0, %s42
      %s29 = sphi 0, %s38
      %s30 = sphi 0, %s27
      %s31 = sphi 0, %s28
      %s32 = sphi 0, %s29
      %s33 = sphi 0, %s30
      %s34 = sphi 0, %s31
      %s35 = sphi 0, %s32
      %s53 = sphi 0, %s55
      %s56 = sphi 0, %s53
      %s57 = sphi 0, %s56
      %s73 = sphi 0, %s57
      %s77 = sphi 0, %s77
      %s79 = sphi 0, %s77
      %s80 = sphi 0, %s79
      %s94 = sphi 0, %s80
      %s98 = sphi 0, %s98
      %s100 = sphi 0, %s98
      %s101 = sphi 0, %s100
      %s115 = sphi 0, %s101
      %s119 = sphi 0, %s119
      %s121 = sphi 0, %s119
      %s122 = sphi 0, %s121
      %s136 = sphi 0, %s122
      %s140 = sphi 0, %s140
      %s142 = sphi 0, %s140
      %s143 = sphi 0, %s142
      %s157 = sphi 0, %s143
      %s161 = sphi 0, %s161
      %s163 = sphi 0, %s161
      %s164 = sphi 0, %s163
      %s178 = sphi 0, %s164
      %s182 = sphi 0, %s182
      %s184 = sphi 0, %s182
      %s185 = sphi 0, %s184
      %s199 = sphi 0, %s185
      %s203 = sphi 0, %s203
      %s205 = sphi 0, %s203
      %s206 = sphi 0, %s205
      %s220 = sphi 0, %s206
      %s224 = sphi 0, %s224
      %s226 = sphi 0, %s224
      %s227 = sphi 0, %s226
      %s241 = sphi 0, %s227
      %s249 = sphi 0, %s251
      %s252 = sphi 0, %s249
      %s253 = sphi 0, %s252
      %s269 = sphi 0, %s253
    $region4: #{tpu_custom_call.1} parent=1 // loop_header_branch
      %23 = sbr.rel (%p21) target = $region8
    $region5: #{tpu_custom_call.1} parent=1 // loop_body
      %s25 = ssub.s32 %s20, 1
      %s26 = ssub.s32 %s20, 2
      %s36 = sadd.s32 1, %s29
      %p37 = scmp.ge.s32.totalorder %s36, 1
      %s38 = scalar_select %p37, 0, %s36
      %s39 = sadd.s32 1, %s28
      %s40 = scalar_select %p37, %s39, %s28
      %p41 = scmp.ge.s32.totalorder %s40, 1
      %s42 = scalar_select %p41, 0, %s40
      %s43 = sadd.s32 1, %s27
      %s44 = scalar_select %p41, %s43, %s27
      %p45 = scmp.ge.s32.totalorder %s44, 2
      %s46 = scalar_select %p45, 0, %s44
      %s47 = sadd.s32 %s28, %s29
      %s48 = sadd.s32 %s42, %s38
      %s49 = ssub.s32 %s27, %s46
      %s50 = ssub.s32 %s47, %s48
      %s51 = sor.u32 %s49, %s50
      %p52 = scmp.eq.s32.totalorder %s51, 0
      %s54 = sadd.s32 %s53, 1
      %s55 = scalar_select %p52, %s53, %s54
      %p58 = pneg %p52
      %p59 = scmp.eq.s32.totalorder %s20, 1
      %p60 = por %p58, %p59
      %p61 = scmp.ne.s32.totalorder %s53, %s56
      %p62 = scmp.eq.s32.totalorder %s20, 0
      %p63 = por %p61, %p62
      %p64 = scmp.ne.s32.totalorder %s53, %s56
      %p65 = scmp.eq.s32.totalorder %s25, 1
      %p66 = por %p64, %p65
      %p67 = scmp.ne.s32.totalorder %s56, %s57
      %p68 = scmp.eq.s32.totalorder %s25, 0
      %p69 = por %p67, %p68
      %p70 = scmp.ne.s32.totalorder %s56, %s57
      %p71 = scmp.eq.s32.totalorder %s26, 1
      %p72 = por %p70, %p71
      %p74 = scmp.ne.s32.totalorder %s57, %s73
      %p75 = scmp.eq.s32.totalorder %s26, 0
      %p76 = por %p74, %p75
      %s78 = sadd.s32 %s77, 1
      %p81 = scmp.eq.s32.totalorder %s20, 1
      %p82 = scmp.ne.s32.totalorder %s77, %s79
      %p83 = scmp.eq.s32.totalorder %s20, 0
      %p84 = por %p82, %p83
      %p85 = scmp.ne.s32.totalorder %s77, %s79
      %p86 = scmp.eq.s32.totalorder %s25, 1
      %p87 = por %p85, %p86
      %p88 = scmp.ne.s32.totalorder %s79, %s80
      %p89 = scmp.eq.s32.totalorder %s25, 0
      %p90 = por %p88, %p89
      %p91 = scmp.ne.s32.totalorder %s79, %s80
      %p92 = scmp.eq.s32.totalorder %s26, 1
      %p93 = por %p91, %p92
      %p95 = scmp.ne.s32.totalorder %s80, %s94
      %p96 = scmp.eq.s32.totalorder %s26, 0
      %p97 = por %p95, %p96
      %s99 = sadd.s32 %s98, 1
      %p102 = scmp.eq.s32.totalorder %s20, 1
      %p103 = scmp.ne.s32.totalorder %s98, %s100
      %p104 = scmp.eq.s32.totalorder %s20, 0
      %p105 = por %p103, %p104
      %p106 = scmp.ne.s32.totalorder %s98, %s100
      %p107 = scmp.eq.s32.totalorder %s25, 1
      %p108 = por %p106, %p107
      %p109 = scmp.ne.s32.totalorder %s100, %s101
      %p110 = scmp.eq.s32.totalorder %s25, 0
      %p111 = por %p109, %p110
      %p112 = scmp.ne.s32.totalorder %s100, %s101
      %p113 = scmp.eq.s32.totalorder %s26, 1
      %p114 = por %p112, %p113
      %p116 = scmp.ne.s32.totalorder %s101, %s115
      %p117 = scmp.eq.s32.totalorder %s26, 0
      %p118 = por %p116, %p117
      %s120 = sadd.s32 %s119, 1
      %p123 = scmp.eq.s32.totalorder %s20, 1
      %p124 = scmp.ne.s32.totalorder %s119, %s121
      %p125 = scmp.eq.s32.totalorder %s20, 0
      %p126 = por %p124, %p125
      %p127 = scmp.ne.s32.totalorder %s119, %s121
      %p128 = scmp.eq.s32.totalorder %s25, 1
      %p129 = por %p127, %p128
      %p130 = scmp.ne.s32.totalorder %s121, %s122
      %p131 = scmp.eq.s32.totalorder %s25, 0
      %p132 = por %p130, %p131
      %p133 = scmp.ne.s32.totalorder %s121, %s122
      %p134 = scmp.eq.s32.totalorder %s26, 1
      %p135 = por %p133, %p134
      %p137 = scmp.ne.s32.totalorder %s122, %s136
      %p138 = scmp.eq.s32.totalorder %s26, 0
      %p139 = por %p137, %p138
      %s141 = sadd.s32 %s140, 1
      %p144 = scmp.eq.s32.totalorder %s20, 1
      %p145 = scmp.ne.s32.totalorder %s140, %s142
      %p146 = scmp.eq.s32.totalorder %s20, 0
      %p147 = por %p145, %p146
      %p148 = scmp.ne.s32.totalorder %s140, %s142
      %p149 = scmp.eq.s32.totalorder %s25, 1
      %p150 = por %p148, %p149
      %p151 = scmp.ne.s32.totalorder %s142, %s143
      %p152 = scmp.eq.s32.totalorder %s25, 0
      %p153 = por %p151, %p152
      %p154 = scmp.ne.s32.totalorder %s142, %s143
      %p155 = scmp.eq.s32.totalorder %s26, 1
      %p156 = por %p154, %p155
      %p158 = scmp.ne.s32.totalorder %s143, %s157
      %p159 = scmp.eq.s32.totalorder %s26, 0
      %p160 = por %p158, %p159
      %s162 = sadd.s32 %s161, 1
      %p165 = scmp.eq.s32.totalorder %s20, 1
      %p166 = scmp.ne.s32.totalorder %s161, %s163
      %p167 = scmp.eq.s32.totalorder %s20, 0
      %p168 = por %p166, %p167
      %p169 = scmp.ne.s32.totalorder %s161, %s163
      %p170 = scmp.eq.s32.totalorder %s25, 1
      %p171 = por %p169, %p170
      %p172 = scmp.ne.s32.totalorder %s163, %s164
      %p173 = scmp.eq.s32.totalorder %s25, 0
      %p174 = por %p172, %p173
      %p175 = scmp.ne.s32.totalorder %s163, %s164
      %p176 = scmp.eq.s32.totalorder %s26, 1
      %p177 = por %p175, %p176
      %p179 = scmp.ne.s32.totalorder %s164, %s178
      %p180 = scmp.eq.s32.totalorder %s26, 0
      %p181 = por %p179, %p180
      %s183 = sadd.s32 %s182, 1
      %p186 = scmp.eq.s32.totalorder %s20, 1
      %p187 = scmp.ne.s32.totalorder %s182, %s184
      %p188 = scmp.eq.s32.totalorder %s20, 0
      %p189 = por %p187, %p188
      %p190 = scmp.ne.s32.totalorder %s182, %s184
      %p191 = scmp.eq.s32.totalorder %s25, 1
      %p192 = por %p190, %p191
      %p193 = scmp.ne.s32.totalorder %s184, %s185
      %p194 = scmp.eq.s32.totalorder %s25, 0
      %p195 = por %p193, %p194
      %p196 = scmp.ne.s32.totalorder %s184, %s185
      %p197 = scmp.eq.s32.totalorder %s26, 1
      %p198 = por %p196, %p197
      %p200 = scmp.ne.s32.totalorder %s185, %s199
      %p201 = scmp.eq.s32.totalorder %s26, 0
      %p202 = por %p200, %p201
      %s204 = sadd.s32 %s203, 1
      %p207 = scmp.eq.s32.totalorder %s20, 1
      %p208 = scmp.ne.s32.totalorder %s203, %s205
      %p209 = scmp.eq.s32.totalorder %s20, 0
      %p210 = por %p208, %p209
      %p211 = scmp.ne.s32.totalorder %s203, %s205
      %p212 = scmp.eq.s32.totalorder %s25, 1
      %p213 = por %p211, %p212
      %p214 = scmp.ne.s32.totalorder %s205, %s206
      %p215 = scmp.eq.s32.totalorder %s25, 0
      %p216 = por %p214, %p215
      %p217 = scmp.ne.s32.totalorder %s205, %s206
      %p218 = scmp.eq.s32.totalorder %s26, 1
      %p219 = por %p217, %p218
      %p221 = scmp.ne.s32.totalorder %s206, %s220
      %p222 = scmp.eq.s32.totalorder %s26, 0
      %p223 = por %p221, %p222
      %s225 = sadd.s32 %s224, 1
      %p228 = scmp.eq.s32.totalorder %s20, 1
      %p229 = scmp.ne.s32.totalorder %s224, %s226
      %p230 = scmp.eq.s32.totalorder %s20, 0
      %p231 = por %p229, %p230
      %p232 = scmp.ne.s32.totalorder %s224, %s226
      %p233 = scmp.eq.s32.totalorder %s25, 1
      %p234 = por %p232, %p233
      %p235 = scmp.ne.s32.totalorder %s226, %s227
      %p236 = scmp.eq.s32.totalorder %s25, 0
      %p237 = por %p235, %p236
      %p238 = scmp.ne.s32.totalorder %s226, %s227
      %p239 = scmp.eq.s32.totalorder %s26, 1
      %p240 = por %p238, %p239
      %p242 = scmp.ne.s32.totalorder %s227, %s241
      %p243 = scmp.eq.s32.totalorder %s26, 0
      %p244 = por %p242, %p243
      %s245 = ssub.s32 %s27, %s46
      %s246 = ssub.s32 %s28, %s42
      %s247 = sor.u32 %s245, %s246
      %p248 = scmp.eq.s32.totalorder %s247, 0
      %s250 = sadd.s32 %s249, 1
      %s251 = scalar_select %p248, %s249, %s250
      %p254 = pneg %p248
      %p255 = scmp.eq.s32.totalorder %s20, 1
      %p256 = por %p254, %p255
      %p257 = scmp.ne.s32.totalorder %s249, %s252
      %p258 = scmp.eq.s32.totalorder %s20, 0
      %p259 = por %p257, %p258
      %p260 = scmp.ne.s32.totalorder %s249, %s252
      %p261 = scmp.eq.s32.totalorder %s25, 1
      %p262 = por %p260, %p261
      %p263 = scmp.ne.s32.totalorder %s252, %s253
      %p264 = scmp.eq.s32.totalorder %s25, 0
      %p265 = por %p263, %p264
      %p266 = scmp.ne.s32.totalorder %s252, %s253
      %p267 = scmp.eq.s32.totalorder %s26, 1
      %p268 = por %p266, %p267
      %p270 = scmp.ne.s32.totalorder %s253, %s269
      %p271 = scmp.eq.s32.totalorder %s26, 0
      %p272 = por %p270, %p271
      %p273 = scmp.le.s32.totalorder 1, %s20
      %p274 = scmp.lt.s32.totalorder %s20, 3
      %p275 = pnand %p273, %p274
      %p276 = pneg %p275
      // Predicated region
      $region9: #{tpu_custom_call.1} parent=5 // pred_check
        _
      $region10: #{tpu_custom_call.1} parent=5 // pred_check_branch
        %278 = sbr.rel (%p275) target = $region12
      $region11: #{tpu_custom_call.1} parent=5 // pred_region
        %s279 = ssub.s32 %s20, 1
        // Predicated region
        $region13: #{tpu_custom_call.1} parent=11 // pred_check
          %p280 = pneg %p90
        $region14: #{tpu_custom_call.1} parent=11 // pred_check_branch
          %282 = sbr.rel (%p280) target = $region16
        $region15: #{tpu_custom_call.1} parent=11 // pred_region
          _
        $region16: #{tpu_custom_call.1} parent=11 // pred_fallthru
          _
        // Predicated region
        $region17: #{tpu_custom_call.1} parent=11 // pred_check
          %p283 = pneg %p111
        $region18: #{tpu_custom_call.1} parent=11 // pred_check_branch
          %285 = sbr.rel (%p283) target = $region20
        $region19: #{tpu_custom_call.1} parent=11 // pred_region
          _
        $region20: #{tpu_custom_call.1} parent=11 // pred_fallthru
          _
        // Predicated region
        $region21: #{tpu_custom_call.1} parent=11 // pred_check
          %p286 = pneg %p132
        $region22: #{tpu_custom_call.1} parent=11 // pred_check_branch
          %288 = sbr.rel (%p286) target = $region24
        $region23: #{tpu_custom_call.1} parent=11 // pred_region
          _
        $region24: #{tpu_custom_call.1} parent=11 // pred_fallthru
          _
        // Predicated region
        $region25: #{tpu_custom_call.1} parent=11 // pred_check
          %p289 = pneg %p153
        $region26: #{tpu_custom_call.1} parent=11 // pred_check_branch
          %291 = sbr.rel (%p289) target = $region28
        $region27: #{tpu_custom_call.1} parent=11 // pred_region
          _
        $region28: #{tpu_custom_call.1} parent=11 // pred_fallthru
          _
        // Predicated region
        $region29: #{tpu_custom_call.1} parent=11 // pred_check
          %p292 = pneg %p174
        $region30: #{tpu_custom_call.1} parent=11 // pred_check_branch
          %294 = sbr.rel (%p292) target = $region32
        $region31: #{tpu_custom_call.1} parent=11 // pred_region
          %296 = vsyncadd [#allocation4], 0
          %s297 = sshll.u32 %s5, 4
          %s298 = int_to_ptr.hbm [resolvable:$true] %s297
          %s299 = sshll.u32 [#allocation3], 4
          %s300 = int_to_ptr.vmem [resolvable:$true] %s299
          %305 = dma.hbm_to_vmem [thread:$0]  %s298, 1024, %s300, [#allocation4], 64, 64, 4
        $region32: #{tpu_custom_call.1} parent=11 // pred_fallthru
          _
        // Predicated region
        $region33: #{tpu_custom_call.1} parent=11 // pred_check
          %p306 = pneg %p195
        $region34: #{tpu_custom_call.1} parent=11 // pred_check_branch
          %308 = sbr.rel (%p306) target = $region36
        $region35: #{tpu_custom_call.1} parent=11 // pred_region
          _
        $region36: #{tpu_custom_call.1} parent=11 // pred_fallthru
          _
        // Predicated region
        $region37: #{tpu_custom_call.1} parent=11 // pred_check
          %p309 = pneg %p216
        $region38: #{tpu_custom_call.1} parent=11 // pred_check_branch
          %311 = sbr.rel (%p309) target = $region40
        $region39: #{tpu_custom_call.1} parent=11 // pred_region
          %313 = vsyncadd [#allocation7], 0
          %s314 = sshll.u32 %s7, 4
          %s315 = int_to_ptr.hbm [resolvable:$true] %s314
          %s316 = sshll.u32 [#allocation6], 4
          %s317 = int_to_ptr.vmem [resolvable:$true] %s316
          %322 = dma.hbm_to_vmem [thread:$0]  %s315, 1024, %s317, [#allocation7], 64, 64, 4
        $region40: #{tpu_custom_call.1} parent=11 // pred_fallthru
          _
        // Predicated region
        $region41: #{tpu_custom_call.1} parent=11 // pred_check
          %p323 = pneg %p237
        $region42: #{tpu_custom_call.1} parent=11 // pred_check_branch
          %325 = sbr.rel (%p323) target = $region44
        $region43: #{tpu_custom_call.1} parent=11 // pred_region
          _
        $region44: #{tpu_custom_call.1} parent=11 // pred_fallthru
          _
      $region12: #{tpu_custom_call.1} parent=5 // pred_fallthru
        _
      %p326 = scmp.lt.s32.totalorder %s20, 2
      // Predicated region
      $region45: #{tpu_custom_call.1} parent=5 // pred_check
        %p327 = pneg %p326
      $region46: #{tpu_custom_call.1} parent=5 // pred_check_branch
        %329 = sbr.rel (%p327) target = $region48
      $region47: #{tpu_custom_call.1} parent=5 // pred_region
        // Predicated region
        $region49: #{tpu_custom_call.1} parent=47 // pred_check
          %p330 = pneg %p63
        $region50: #{tpu_custom_call.1} parent=47 // pred_check_branch
          %332 = sbr.rel (%p330) target = $region52
        $region51: #{tpu_custom_call.1} parent=47 // pred_region
          %s333 = sadd.s32 %s28, %s29
          %s334 = smul.u32 8, %s333
          %p335 = scmp.lt.s32.totalorder %s27, 1
          %s336 = scalar_select %p335, %s27, 1
          %p337 = scmp.lt.s32.totalorder %s334, 7
          %s338 = scalar_select %p337, %s334, 7
          %s339 = smul.addr %s336, 8
          %s340 = sadd.s32 %s338, %s339
          %s341 = smul.addr %s340, 4
          %s342 = scalar_lea.vmem %s0, %s341
          %s343 = sadd.s32 %s28, %s29
          %s344 = smul.u32 8, %s343
        $region52: #{tpu_custom_call.1} parent=47 // pred_fallthru
          _
      $region48: #{tpu_custom_call.1} parent=5 // pred_fallthru
        _
      %p345 = scmp.le.s32.totalorder 1, %s20
      %p346 = scmp.lt.s32.totalorder %s20, 3
      %p347 = pnand %p345, %p346
      %p348 = pneg %p347
      // Predicated region
      $region53: #{tpu_custom_call.1} parent=5 // pred_check
        _
      $region54: #{tpu_custom_call.1} parent=5 // pred_check_branch
        %350 = sbr.rel (%p347) target = $region56
      $region55: #{tpu_custom_call.1} parent=5 // pred_region
        %s351 = ssub.s32 %s20, 1
        // Predicated region
        $region57: #{tpu_custom_call.1} parent=55 // pred_check
          %p352 = pneg %p174
        $region58: #{tpu_custom_call.1} parent=55 // pred_check_branch
          %354 = sbr.rel (%p352) target = $region60
        $region59: #{tpu_custom_call.1} parent=55 // pred_region
          %356 = dma.done [#allocation4], 1024
        $region60: #{tpu_custom_call.1} parent=55 // pred_fallthru
          _
        // Predicated region
        $region61: #{tpu_custom_call.1} parent=55 // pred_check
          %p357 = pneg %p216
        $region62: #{tpu_custom_call.1} parent=55 // pred_check_branch
          %359 = sbr.rel (%p357) target = $region64
        $region63: #{tpu_custom_call.1} parent=55 // pred_region
          %361 = dma.done [#allocation7], 1024
        $region64: #{tpu_custom_call.1} parent=55 // pred_fallthru
          _
        %s362 = sadd.s32 %s31, %s32
        %s363 = smul.u32 8, %s362
        %p364 = scmp.lt.s32.totalorder %s30, 1
        %s365 = scalar_select %p364, %s30, 1
        %p366 = scmp.lt.s32.totalorder %s363, 7
        %s367 = scalar_select %p366, %s363, 7
        %s368 = smul.addr %s365, 8
        %s369 = sadd.s32 %s367, %s368
        %s370 = smul.addr %s369, 4
        %s371 = scalar_lea.vmem %s0, %s370
        %p372 = pneg %p69
        %p373 = pneg %p66
        %p374 = pneg %p90
        %p375 = pneg %p87
        %p376 = pneg %p111
        %p377 = pneg %p108
        %p378 = pneg %p132
        %p379 = pneg %p129
        %p380 = pneg %p153
        %p381 = pneg %p150
        %p382 = pneg %p174
        %p383 = pneg %p171
        %p384 = pneg %p195
        %p385 = pneg %p192
        %p386 = pneg %p216
        %p387 = pneg %p213
        %p388 = pneg %p237
        %p389 = pneg %p234
        %p390 = pneg %p265
        %p391 = pneg %p262
        %s392 = sand.u32 %s252, 1
        %s393 = scalar_lea.sflag [#allocation5], %s392
        %s394 = sand.u32 %s252, 1
        %s395 = scalar_lea.vmem [#allocation8], %s394
        %s396 = sadd.s32 %s31, %s32
        %s397 = smul.u32 8, %s396
        %p398 = scmp.lt.s32.totalorder %s30, 1
        %s399 = scalar_select %p398, %s30, 1
        %p400 = scmp.lt.s32.totalorder %s397, 7
        %s401 = scalar_select %p400, %s397, 7
        %s402 = smul.addr %s399, 8
        %s403 = sadd.s32 %s401, %s402
        %s404 = smul.addr %s403, 4
        %s405 = scalar_lea.vmem %s0, %s404
        %s406 = sadd.s32 %s31, %s32
        %s407 = smul.u32 8, %s406
        %p409 = scmp.eq.s32.totalorder %s32, 0
        // Predicated region
        $region65: #{tpu_custom_call.1} parent=55 // pred_check
          %p410 = pneg %p409
        $region66: #{tpu_custom_call.1} parent=55 // pred_check_branch
          %412 = sbr.rel (%p410) target = $region68
        $region67: #{tpu_custom_call.1} parent=55 // pred_region
          %413 = vst [vmem:[#allocation2] sm:$0x1] 0.0
        $region68: #{tpu_custom_call.1} parent=55 // pred_fallthru
          _
        %v414 = vld [vmem:[%s405] sm:$0xf]
        %v415 = vld [vmem:[%s405 + $0x4] sm:$0xf]
        %v416 = vld [vmem:[%s405 + $0x8] sm:$0xf]
        %v417 = vld [vmem:[%s405 + $0xc] sm:$0xf]
        %v418 = vld [vmem:[%s405 + $0x10] sm:$0xf]
        %v419 = vld [vmem:[%s405 + $0x14] sm:$0xf]
        %v420 = vld [vmem:[%s405 + $0x18] sm:$0xf]
        %v421 = vld [vmem:[%s405 + $0x1c] sm:$0xf]
        %v422 = vld [vmem:[%s1] sm:$0xf]
        %v423 = vld [vmem:[%s1 + $0x4] sm:$0xf]
        %v424 = vld [vmem:[%s1 + $0x8] sm:$0xf]
        %v425 = vld [vmem:[%s1 + $0xc] sm:$0xf]
        %v426 = vld [vmem:[%s1 + $0x10] sm:$0xf]
        %v427 = vld [vmem:[%s1 + $0x14] sm:$0xf]
        %v428 = vld [vmem:[%s2] sm:$0x1]
        %v430 = vperm.slane %v428, 0
        %v440 = vunpack.c.l.b16 %v414
        %v441 = vunpack.c.l.b16 %v415
        %v442 = vunpack.c.l.b16 %v416
        %v443 = vunpack.c.l.b16 %v417
        %v444 = vunpack.c.l.b16 %v418
        %v445 = vunpack.c.l.b16 %v419
        %v446 = vunpack.c.l.b16 %v420
        %v447 = vunpack.c.l.b16 %v421
        %v448 = vpack.c.b16 %v441, %v440
        %v449 = vpack.c.b16 %v443, %v442
        %v450 = vpack.c.b16 %v445, %v444
        %v451 = vpack.c.b16 %v447, %v446
        %v458 = vunpack.c.l.b16 %v422
        %v459 = vunpack.c.l.b16 %v423
        %v460 = vunpack.c.l.b16 %v424
        %v461 = vunpack.c.l.b16 %v425
        %v462 = vunpack.c.l.b16 %v426
        %v463 = vunpack.c.l.b16 %v427
        %v464 = vpack.c.b16 %v459, %v458
        %v465 = vpack.c.b16 %v461, %v460
        %v466 = vpack.c.b16 %v463, %v462
        %vm470 = vcmask 392192
        %v472 = vsel %vm470, %v448, 0
        %v475 = vsel %vm470, %v449, 0
        %v478 = vsel %vm470, %v450, 0
        %v481 = vsel %vm470, %v451, 0
        %483 = vmatpush.bf16.msra.mxu0 0
        %484 = vmatpush.bf16.msra.mxu0 0
        %485 = vmatpush.bf16.msra.mxu0 0
        %486 = vmatpush.bf16.msra.mxu0 0
        %487 = vmatpush.bf16.msra.mxu0 0
        %488 = vmatpush.bf16.msra.mxu0 %v466
        %489 = vmatpush.bf16.msra.mxu0 %v465
        %490 = vmatpush.bf16.msra.mxu0 %v464
        %491 = vmatmul.bf16.gmra.mxu0 %v472
        %v492 = vpop.f32.mrf.mxu0
        %v493 = vadd.f32 %v430, %v492
        %v494 = vpop.f32.mrf.mxu0
        %v495 = vadd.f32 %v430, %v494
        %496 = vmatmul.bf16.gmra.mxu0 %v475
        %v497 = vpop.f32.mrf.mxu0
        %v498 = vadd.f32 %v430, %v497
        %v499 = vpop.f32.mrf.mxu0
        %v500 = vadd.f32 %v430, %v499
        %501 = vmatmul.bf16.gmra.mxu0 %v478
        %v502 = vpop.f32.mrf.mxu0
        %v503 = vadd.f32 %v430, %v502
        %v504 = vpop.f32.mrf.mxu0
        %v505 = vadd.f32 %v430, %v504
        %506 = vmatmul.bf16.gmra.mxu0 %v481
        %v507 = vpop.f32.mrf.mxu0
        %v508 = vadd.f32 %v430, %v507
        %v509 = vpop.f32.mrf.mxu0
        %v510 = vadd.f32 %v430, %v509
        %511 = vdwg.mxu0
        %v512 = vmul.f32 %v493, 0.1
        %v513 = vmul.f32 %v495, 0.1
        %v514 = vmul.f32 %v498, 0.1
        %v515 = vmul.f32 %v500, 0.1
        %v516 = vmul.f32 %v503, 0.1
        %v517 = vmul.f32 %v505, 0.1
        %v518 = vmul.f32 %v508, 0.1
        %v519 = vmul.f32 %v510, 0.1
        %v520 = vmax.f32 %v493, %v512
        %v521 = vmax.f32 %v495, %v513
        %v522 = vmax.f32 %v498, %v514
        %v523 = vmax.f32 %v500, %v515
        %v524 = vmax.f32 %v503, %v516
        %v525 = vmax.f32 %v505, %v517
        %v526 = vmax.f32 %v508, %v518
        %v527 = vmax.f32 %v510, %v519
        %v528 = vpack.c.bf16 %v521, %v520
        %v529 = vpack.c.bf16 %v523, %v522
        %v530 = vpack.c.bf16 %v525, %v524
        %v531 = vpack.c.bf16 %v527, %v526
        %v532 = vld [vmem:[%s3] sm:$0xf]
        %v533 = vld [vmem:[%s3 + $0x4] sm:$0xf]
        %v534 = vld [vmem:[%s3 + $0x8] sm:$0xf]
        %v535 = vld [vmem:[%s3 + $0xc] sm:$0xf]
        %v536 = vld [vmem:[%s3 + $0x10] sm:$0xf]
        %v537 = vld [vmem:[%s3 + $0x14] sm:$0xf]
        %v538 = vld [vmem:[%s3 + $0x18] sm:$0xf]
        %v539 = vld [vmem:[%s3 + $0x1c] sm:$0xf]
        %v540 = vld [vmem:[%s3 + $0x20] sm:$0xf]
        %v541 = vld [vmem:[%s3 + $0x24] sm:$0xf]
        %v542 = vld [vmem:[%s3 + $0x28] sm:$0xf]
        %v543 = vld [vmem:[%s3 + $0x2c] sm:$0xf]
        %v544 = vld [vmem:[%s3 + $0x30] sm:$0xf]
        %v545 = vld [vmem:[%s3 + $0x34] sm:$0xf]
        %v546 = vld [vmem:[%s3 + $0x38] sm:$0xf]
        %v547 = vld [vmem:[%s3 + $0x3c] sm:$0xf]
        %v548 = vld [vmem:[%s4] sm:$0x1]
        %v550 = vperm.slane %v548, 0
        %v568 = vunpack.c.l.b16 %v532
        %v569 = vunpack.c.l.b16 %v533
        %v570 = vunpack.c.l.b16 %v534
        %v571 = vunpack.c.l.b16 %v535
        %v572 = vunpack.c.l.b16 %v536
        %v573 = vunpack.c.l.b16 %v537
        %v574 = vunpack.c.l.b16 %v538
        %v575 = vunpack.c.l.b16 %v539
        %v576 = vunpack.c.l.b16 %v540
        %v577 = vunpack.c.l.b16 %v541
        %v578 = vunpack.c.l.b16 %v542
        %v579 = vunpack.c.l.b16 %v543
        %v580 = vunpack.c.l.b16 %v544
        %v581 = vunpack.c.l.b16 %v545
        %v582 = vunpack.c.l.b16 %v546
        %v583 = vunpack.c.l.b16 %v547
        %v584 = vpack.c.b16 %v569, %v568
        %v585 = vpack.c.b16 %v571, %v570
        %v586 = vpack.c.b16 %v573, %v572
        %v587 = vpack.c.b16 %v575, %v574
        %v588 = vpack.c.b16 %v577, %v576
        %v589 = vpack.c.b16 %v579, %v578
        %v590 = vpack.c.b16 %v581, %v580
        %v591 = vpack.c.b16 %v583, %v582
        %600 = vmatpush.bf16.msra.mxu0 %v591
        %601 = vmatpush.bf16.msra.mxu0 %v590
        %602 = vmatpush.bf16.msra.mxu0 %v589
        %603 = vmatpush.bf16.msra.mxu0 %v588
        %604 = vmatpush.bf16.msra.mxu0 %v587
        %605 = vmatpush.bf16.msra.mxu0 %v586
        %606 = vmatpush.bf16.msra.mxu0 %v585
        %607 = vmatpush.bf16.msra.mxu0 %v584
        %608 = vmatmul.bf16.gmra.mxu0 %v528
        %v609 = vpop.f32.mrf.mxu0
        %v610 = vadd.f32 %v550, %v609
        %v611 = vpop.f32.mrf.mxu0
        %v612 = vadd.f32 %v550, %v611
        %613 = vmatmul.bf16.gmra.mxu0 %v529
        %v614 = vpop.f32.mrf.mxu0
        %v615 = vadd.f32 %v550, %v614
        %v616 = vpop.f32.mrf.mxu0
        %v617 = vadd.f32 %v550, %v616
        %618 = vmatmul.bf16.gmra.mxu0 %v530
        %v619 = vpop.f32.mrf.mxu0
        %v620 = vadd.f32 %v550, %v619
        %v621 = vpop.f32.mrf.mxu0
        %v622 = vadd.f32 %v550, %v621
        %623 = vmatmul.bf16.gmra.mxu0 %v531
        %v624 = vpop.f32.mrf.mxu0
        %v625 = vadd.f32 %v550, %v624
        %v626 = vpop.f32.mrf.mxu0
        %v627 = vadd.f32 %v550, %v626
        %628 = vdwg.mxu0
        %v629 = vmul.f32 %v610, 0.1
        %v630 = vmul.f32 %v612, 0.1
        %v631 = vmul.f32 %v615, 0.1
        %v632 = vmul.f32 %v617, 0.1
        %v633 = vmul.f32 %v620, 0.1
        %v634 = vmul.f32 %v622, 0.1
        %v635 = vmul.f32 %v625, 0.1
        %v636 = vmul.f32 %v627, 0.1
        %v637 = vmax.f32 %v610, %v629
        %v638 = vmax.f32 %v612, %v630
        %v639 = vmax.f32 %v615, %v631
        %v640 = vmax.f32 %v617, %v632
        %v641 = vmax.f32 %v620, %v633
        %v642 = vmax.f32 %v622, %v634
        %v643 = vmax.f32 %v625, %v635
        %v644 = vmax.f32 %v627, %v636
        %v645 = vpack.c.bf16 %v638, %v637
        %v646 = vpack.c.bf16 %v640, %v639
        %v647 = vpack.c.bf16 %v642, %v641
        %v648 = vpack.c.bf16 %v644, %v643
        %v649 = vld [vmem:[#allocation3] sm:$0xf]
        %v650 = vld [vmem:[#allocation3 + $0x4] sm:$0xf]
        %v651 = vld [vmem:[#allocation3 + $0x8] sm:$0xf]
        %v652 = vld [vmem:[#allocation3 + $0xc] sm:$0xf]
        %v653 = vld [vmem:[#allocation3 + $0x10] sm:$0xf]
        %v654 = vld [vmem:[#allocation3 + $0x14] sm:$0xf]
        %v655 = vld [vmem:[#allocation3 + $0x18] sm:$0xf]
        %v656 = vld [vmem:[#allocation3 + $0x1c] sm:$0xf]
        %v657 = vld [vmem:[#allocation3 + $0x20] sm:$0xf]
        %v658 = vld [vmem:[#allocation3 + $0x24] sm:$0xf]
        %v659 = vld [vmem:[#allocation3 + $0x28] sm:$0xf]
        %v660 = vld [vmem:[#allocation3 + $0x2c] sm:$0xf]
        %v661 = vld [vmem:[#allocation3 + $0x30] sm:$0xf]
        %v662 = vld [vmem:[#allocation3 + $0x34] sm:$0xf]
        %v663 = vld [vmem:[#allocation3 + $0x38] sm:$0xf]
        %v664 = vld [vmem:[#allocation3 + $0x3c] sm:$0xf]
        %v665 = vld [vmem:[%s6] sm:$0x1]
        %v667 = vperm.slane %v665, 0
        %v685 = vunpack.c.l.b16 %v649
        %v686 = vunpack.c.l.b16 %v650
        %v687 = vunpack.c.l.b16 %v651
        %v688 = vunpack.c.l.b16 %v652
        %v689 = vunpack.c.l.b16 %v653
        %v690 = vunpack.c.l.b16 %v654
        %v691 = vunpack.c.l.b16 %v655
        %v692 = vunpack.c.l.b16 %v656
        %v693 = vunpack.c.l.b16 %v657
        %v694 = vunpack.c.l.b16 %v658
        %v695 = vunpack.c.l.b16 %v659
        %v696 = vunpack.c.l.b16 %v660
        %v697 = vunpack.c.l.b16 %v661
        %v698 = vunpack.c.l.b16 %v662
        %v699 = vunpack.c.l.b16 %v663
        %v700 = vunpack.c.l.b16 %v664
        %v701 = vpack.c.b16 %v686, %v685
        %v702 = vpack.c.b16 %v688, %v687
        %v703 = vpack.c.b16 %v690, %v689
        %v704 = vpack.c.b16 %v692, %v691
        %v705 = vpack.c.b16 %v694, %v693
        %v706 = vpack.c.b16 %v696, %v695
        %v707 = vpack.c.b16 %v698, %v697
        %v708 = vpack.c.b16 %v700, %v699
        %717 = vmatpush.bf16.msra.mxu0 %v708
        %718 = vmatpush.bf16.msra.mxu0 %v707
        %719 = vmatpush.bf16.msra.mxu0 %v706
        %720 = vmatpush.bf16.msra.mxu0 %v705
        %721 = vmatpush.bf16.msra.mxu0 %v704
        %722 = vmatpush.bf16.msra.mxu0 %v703
        %723 = vmatpush.bf16.msra.mxu0 %v702
        %724 = vmatpush.bf16.msra.mxu0 %v701
        %725 = vmatmul.bf16.gmra.mxu0 %v645
        %v726 = vpop.f32.mrf.mxu0
        %v727 = vadd.f32 %v667, %v726
        %v728 = vpop.f32.mrf.mxu0
        %v729 = vadd.f32 %v667, %v728
        %730 = vmatmul.bf16.gmra.mxu0 %v646
        %v731 = vpop.f32.mrf.mxu0
        %v732 = vadd.f32 %v667, %v731
        %v733 = vpop.f32.mrf.mxu0
        %v734 = vadd.f32 %v667, %v733
        %735 = vmatmul.bf16.gmra.mxu0 %v647
        %v736 = vpop.f32.mrf.mxu0
        %v737 = vadd.f32 %v667, %v736
        %v738 = vpop.f32.mrf.mxu0
        %v739 = vadd.f32 %v667, %v738
        %740 = vmatmul.bf16.gmra.mxu0 %v648
        %v741 = vpop.f32.mrf.mxu0
        %v742 = vadd.f32 %v667, %v741
        %v743 = vpop.f32.mrf.mxu0
        %v744 = vadd.f32 %v667, %v743
        %745 = vdwg.mxu0
        %v746 = vmul.f32 %v727, 0.1
        %v747 = vmul.f32 %v729, 0.1
        %v748 = vmul.f32 %v732, 0.1
        %v749 = vmul.f32 %v734, 0.1
        %v750 = vmul.f32 %v737, 0.1
        %v751 = vmul.f32 %v739, 0.1
        %v752 = vmul.f32 %v742, 0.1
        %v753 = vmul.f32 %v744, 0.1
        %v754 = vmax.f32 %v727, %v746
        %v755 = vmax.f32 %v729, %v747
        %v756 = vmax.f32 %v732, %v748
        %v757 = vmax.f32 %v734, %v749
        %v758 = vmax.f32 %v737, %v750
        %v759 = vmax.f32 %v739, %v751
        %v760 = vmax.f32 %v742, %v752
        %v761 = vmax.f32 %v744, %v753
        %v762 = vpack.c.bf16 %v755, %v754
        %v763 = vpack.c.bf16 %v757, %v756
        %v764 = vpack.c.bf16 %v759, %v758
        %v765 = vpack.c.bf16 %v761, %v760
        %v766 = vld [vmem:[#allocation6] sm:$0xf]
        %v767 = vld [vmem:[#allocation6 + $0x4] sm:$0xf]
        %v768 = vld [vmem:[#allocation6 + $0x8] sm:$0xf]
        %v769 = vld [vmem:[#allocation6 + $0xc] sm:$0xf]
        %v770 = vld [vmem:[#allocation6 + $0x10] sm:$0xf]
        %v771 = vld [vmem:[#allocation6 + $0x14] sm:$0xf]
        %v772 = vld [vmem:[#allocation6 + $0x18] sm:$0xf]
        %v773 = vld [vmem:[#allocation6 + $0x1c] sm:$0xf]
        %v774 = vld [vmem:[#allocation6 + $0x20] sm:$0xf]
        %v775 = vld [vmem:[#allocation6 + $0x24] sm:$0xf]
        %v776 = vld [vmem:[#allocation6 + $0x28] sm:$0xf]
        %v777 = vld [vmem:[#allocation6 + $0x2c] sm:$0xf]
        %v778 = vld [vmem:[#allocation6 + $0x30] sm:$0xf]
        %v779 = vld [vmem:[#allocation6 + $0x34] sm:$0xf]
        %v780 = vld [vmem:[#allocation6 + $0x38] sm:$0xf]
        %v781 = vld [vmem:[#allocation6 + $0x3c] sm:$0xf]
        %v782 = vld [vmem:[%s8] sm:$0x1]
        %v784 = vperm.slane %v782, 0
        %v802 = vunpack.c.l.b16 %v766
        %v803 = vunpack.c.l.b16 %v767
        %v804 = vunpack.c.l.b16 %v768
        %v805 = vunpack.c.l.b16 %v769
        %v806 = vunpack.c.l.b16 %v770
        %v807 = vunpack.c.l.b16 %v771
        %v808 = vunpack.c.l.b16 %v772
        %v809 = vunpack.c.l.b16 %v773
        %v810 = vunpack.c.l.b16 %v774
        %v811 = vunpack.c.l.b16 %v775
        %v812 = vunpack.c.l.b16 %v776
        %v813 = vunpack.c.l.b16 %v777
        %v814 = vunpack.c.l.b16 %v778
        %v815 = vunpack.c.l.b16 %v779
        %v816 = vunpack.c.l.b16 %v780
        %v817 = vunpack.c.l.b16 %v781
        %v818 = vpack.c.b16 %v803, %v802
        %v819 = vpack.c.b16 %v805, %v804
        %v820 = vpack.c.b16 %v807, %v806
        %v821 = vpack.c.b16 %v809, %v808
        %v822 = vpack.c.b16 %v811, %v810
        %v823 = vpack.c.b16 %v813, %v812
        %v824 = vpack.c.b16 %v815, %v814
        %v825 = vpack.c.b16 %v817, %v816
        %834 = vmatpush.bf16.msra.mxu0 %v825
        %835 = vmatpush.bf16.msra.mxu0 %v824
        %836 = vmatpush.bf16.msra.mxu0 %v823
        %837 = vmatpush.bf16.msra.mxu0 %v822
        %838 = vmatpush.bf16.msra.mxu0 %v821
        %839 = vmatpush.bf16.msra.mxu0 %v820
        %840 = vmatpush.bf16.msra.mxu0 %v819
        %841 = vmatpush.bf16.msra.mxu0 %v818
        %842 = vmatmul.bf16.gmra.mxu0 %v762
        %v843 = vpop.f32.mrf.mxu0
        %v844 = vadd.f32 %v784, %v843
        %v845 = vpop.f32.mrf.mxu0
        %v846 = vadd.f32 %v784, %v845
        %847 = vmatmul.bf16.gmra.mxu0 %v763
        %v848 = vpop.f32.mrf.mxu0
        %v849 = vadd.f32 %v784, %v848
        %v850 = vpop.f32.mrf.mxu0
        %v851 = vadd.f32 %v784, %v850
        %852 = vmatmul.bf16.gmra.mxu0 %v764
        %v853 = vpop.f32.mrf.mxu0
        %v854 = vadd.f32 %v784, %v853
        %v855 = vpop.f32.mrf.mxu0
        %v856 = vadd.f32 %v784, %v855
        %857 = vmatmul.bf16.gmra.mxu0 %v765
        %v858 = vpop.f32.mrf.mxu0
        %v859 = vadd.f32 %v784, %v858
        %v860 = vpop.f32.mrf.mxu0
        %v861 = vadd.f32 %v784, %v860
        %862 = vdwg.mxu0
        %v863 = vmul.f32 %v844, 0.1
        %v864 = vmul.f32 %v846, 0.1
        %v865 = vmul.f32 %v849, 0.1
        %v866 = vmul.f32 %v851, 0.1
        %v867 = vmul.f32 %v854, 0.1
        %v868 = vmul.f32 %v856, 0.1
        %v869 = vmul.f32 %v859, 0.1
        %v870 = vmul.f32 %v861, 0.1
        %v871 = vmax.f32 %v844, %v863
        %v872 = vmax.f32 %v846, %v864
        %v873 = vmax.f32 %v849, %v865
        %v874 = vmax.f32 %v851, %v866
        %v875 = vmax.f32 %v854, %v867
        %v876 = vmax.f32 %v856, %v868
        %v877 = vmax.f32 %v859, %v869
        %v878 = vmax.f32 %v861, %v870
        %v879 = vld [vmem:[#allocation2] sm:$0x1]
        %v880 = vadd.f32 %v871, %v872
        %v881 = vadd.f32 %v880, %v873
        %v882 = vadd.f32 %v881, %v874
        %v883 = vadd.f32 %v882, %v875
        %v884 = vadd.f32 %v883, %v876
        %v885 = vadd.f32 %v884, %v877
        %v886 = vadd.f32 %v885, %v878
        %v887 = vrot.slane %v886, 4
        %v888 = vadd.f32 %v886, %v887
        %v889 = vrot.slane %v888, 2
        %v890 = vadd.f32 %v888, %v889
        %v891 = vrot.slane %v890, 1
        %v892 = vadd.f32 %v890, %v891
        %v893 = vadd.f32 %v879, %v892
        %894 = vst [vmem:[#allocation2] sm:$0x1] %v893
        // Predicated region
        $region69: #{tpu_custom_call.1} parent=55 // pred_check
          %p895 = pneg %p409
        $region70: #{tpu_custom_call.1} parent=55 // pred_check_branch
          %897 = sbr.rel (%p895) target = $region72
        $region71: #{tpu_custom_call.1} parent=55 // pred_region
          %v898 = vld [vmem:[#allocation2] sm:$0x1]
          %899 = vst [vmem:[%s395] sm:$0x1] %v898
        $region72: #{tpu_custom_call.1} parent=55 // pred_fallthru
          _
        %s900 = sand.u32 %s252, 1
        %s901 = scalar_lea.sflag [#allocation5], %s900
        %s902 = sand.u32 %s252, 1
        %s903 = scalar_lea.vmem [#allocation8], %s902
        // Predicated region
        $region73: #{tpu_custom_call.1} parent=55 // pred_check
          %p904 = pneg %p262
        $region74: #{tpu_custom_call.1} parent=55 // pred_check_branch
          %906 = sbr.rel (%p904) target = $region76
        $region75: #{tpu_custom_call.1} parent=55 // pred_region
          %908 = vsyncadd %s901, 0
          %s909 = sadd.s32 %s31, %s30
          %s910 = scalar_lea.hbm %s9, %s909
          %s912 = sshll.u32 %s903, 4
          %s913 = int_to_ptr.vmem [resolvable:$true] %s912
          %s914 = sshll.u32 %s910, 4
          %s915 = int_to_ptr.hbm [resolvable:$true] %s914
          %917 = dma.vmem_to_hbm [thread:$0]  %s913, 16, %s915, %s901
        $region76: #{tpu_custom_call.1} parent=55 // pred_fallthru
          _
      $region56: #{tpu_custom_call.1} parent=5 // pred_fallthru
        _
      %p918 = scmp.le.s32.totalorder 2, %s20
      // Predicated region
      $region77: #{tpu_custom_call.1} parent=5 // pred_check
        %p919 = pneg %p918
      $region78: #{tpu_custom_call.1} parent=5 // pred_check_branch
        %921 = sbr.rel (%p919) target = $region80
      $region79: #{tpu_custom_call.1} parent=5 // pred_region
        %s922 = ssub.s32 %s20, 2
        // Predicated region
        $region81: #{tpu_custom_call.1} parent=79 // pred_check
          %p923 = pneg %p268
        $region82: #{tpu_custom_call.1} parent=79 // pred_check_branch
          %925 = sbr.rel (%p923) target = $region84
        $region83: #{tpu_custom_call.1} parent=79 // pred_region
          %s926 = sand.u32 %s253, 1
          %s927 = scalar_lea.sflag [#allocation5], %s926
          %s928 = sand.u32 %s253, 1
          %s929 = scalar_lea.vmem [#allocation8], %s928
          %931 = dma.done %s927, 16
        $region84: #{tpu_custom_call.1} parent=79 // pred_fallthru
          _
      $region80: #{tpu_custom_call.1} parent=5 // pred_fallthru
        _
    $region6: #{tpu_custom_call.1} parent=1 // loop_footer
      %s24 = sadd.s32 1, %s20
    $region7: #{tpu_custom_call.1} parent=1 // loop_footer_branch
      %19 = sbr.rel target = $region3
    $region8: #{tpu_custom_call.1} parent=1 // loop_exit
      _
    %932 = vsyncpa [#allocation4], 1
    %s933 = scalar_lea.sflag [#allocation4], 1
    %934 = vsyncpa %s933, 1
    %935 = vsyncpa [#allocation7], 1
    %936 = vsyncpa [#allocation5], 1
    %s937 = scalar_lea.sflag [#allocation5], 1
    %938 = vsyncpa %s937, 1

</llo_original>
